<compile_context>
chip_gen: v5e
topology: v5e:2x2
jax: 0.10.0
libtpu: 0.0.40
codegen_flags: <defaults>
</compile_context>

<pallas_src>
import jax
import jax.numpy as jnp
from jax.experimental import pallas as pl
from jax.experimental.pallas import tpu as pltpu

EPS = 1e-5
NEG_SLOPE = 0.01  # PyTorch LeakyReLU default
HIDDEN = 128


# --------------------------------------------------------------------------------------
# Kernel
# --------------------------------------------------------------------------------------
def simple_nn_kernel(
    x_ref,                      # (TILE_B, D)    bf16 (pre-cast in the wrapper)
    w1_ref, b1_ref,             # (D, 128) bf16, (1, 128) f32   (BN folded)
    w2_ref, b2_ref,             # (128, 128) bf16, (1, 128) f32
    w3_ref, b3_ref,             # (128, 128) bf16, (1, 128) f32
    w4_ref, b4_ref,             # (1, 128) f32 row, (1, 1) f32
    o_ref,                      # (1, TILE_B)    f32 (lane-dense output slab)
):
    def hidden(h_bf16, w_ref, b_ref):
        # bf16 operands into the MXU, f32 accumulate; bias + LeakyReLU in f32 on the VPU.
        z = jnp.dot(h_bf16, w_ref[...], preferred_element_type=jnp.float32) + b_ref[...]
        return jnp.where(z > 0, z, NEG_SLOPE * z)

    h = hidden(x_ref[...], w1_ref, b1_ref)                  # x already bf16 (wrapper cast)
    h = hidden(h.astype(jnp.bfloat16), w2_ref, b2_ref)
    h = hidden(h.astype(jnp.bfloat16), w3_ref, b3_ref)

    # Final Linear(128, 1): VPU multiply + cross-lane reduce (XLU) instead of an N=1 MXU
    # matmul; the (tile_b,) reduce result is relaid out to a lane-dense (1, tile_b) row
    # (stays in vregs; no materialized VMEM round-trip observed for this pattern).
    out = jnp.sum(h * w4_ref[...], axis=-1)                 # (TILE_B,)
    o_ref[...] = out.reshape(1, -1) + b4_ref[...]           # (1, TILE_B)


# --------------------------------------------------------------------------------------
# Parameter folding (done ONCE, outside the hot forward path)
# --------------------------------------------------------------------------------------
def fold_params(params):
    """Fold eval-mode BatchNorm into the Linear layers; bf16-cast MXU weights."""
    (w1, b1, g1, be1, m1, v1,
     w2, b2, g2, be2, m2, v2,
     w3, b3, g3, be3, m3, v3,
     w4, b4) = params

    def fold(w, b, g, beta, mean, var):
        s = g * jax.lax.rsqrt(var + EPS)              # (1, out)
        w_f = (w * s).astype(jnp.bfloat16)            # (in, out) bf16 for the MXU
        b_f = (b - mean) * s + beta                   # (1, out) f32
        return w_f, b_f

    w1f, b1f = fold(w1, b1, g1, be1, m1, v1)
    w2f, b2f = fold(w2, b2, g2, be2, m2, v2)
    w3f, b3f = fold(w3, b3, g3, be3, m3, v3)
    w4_row = w4.reshape(1, -1)                        # (1, 128) f32 (VPU elementwise)
    return (w1f, b1f, w2f, b2f, w3f, b3f, w4_row, b4)


# --------------------------------------------------------------------------------------
# Tile selection + wrapper
# --------------------------------------------------------------------------------------
def _choose_tile_b(batch, max_tile_b):
    """Largest multiple-of-128 batch tile <= max_tile_b giving >= 2 tiles (prefer an
    evenly dividing tile so v7x megacore gets balanced work); tiny batches -> 128."""
    max_tile_b = max(128, (max_tile_b // 128) * 128)
    if batch <= 128:
        return 128
    candidates = range(max_tile_b, 127, -128)
    for t in candidates:                       # prefer tiles that divide the batch
        if batch % t == 0 and batch // t >= 2:
            return t
    for t in candidates:                       # otherwise accept a partial last tile
        if -(-batch // t) >= 2:
            return t
    return 128


def simple_nn_forward(x, folded, *, max_tile_b=1024):
    """x: [B, D] float32. folded: output of fold_params. Returns [B, 1] float32."""
    B, D = x.shape
    (w1f, b1f, w2f, b2f, w3f, b3f, w4_row, b4) = folded

    tile_b = _choose_tile_b(B, max_tile_b)
    num_tiles = pl.cdiv(B, tile_b)

    # Halve x DMA bytes / vreg footprint; numerically identical to the previous
    # in-kernel layer-1 cast.
    x_bf16 = x.astype(jnp.bfloat16)

    def const_spec(arr):
        # Weights / biases: one block = whole array, same block every grid step
        # (DMA'd once, VMEM-resident across the batch loop).
        return pl.BlockSpec(arr.shape, lambda i: (0, 0))

    in_specs = [
        pl.BlockSpec((tile_b, D), lambda i: (i, 0)),     # x: tiled over batch
        const_spec(w1f), const_spec(b1f),
        const_spec(w2f), const_spec(b2f),
        const_spec(w3f), const_spec(b3f),
        const_spec(w4_row), const_spec(b4),
    ]
    out_specs = pl.BlockSpec((1, tile_b), lambda i: (0, i))   # lane-dense output slab

    # Rough per-tile VMEM budget (double-buffered x tile + output row, f32 intermediates,
    # resident bf16 weights) with 2x headroom; keeps v5e's small default scoped VMEM from
    # forcing smaller blocking, capped at v7x's 64 MiB physical VMEM.
    est = (2 * tile_b * D * 2              # bf16 x tile, double-buffered
           + 2 * tile_b * 4                # f32 output row, double-buffered
           + 4 * tile_b * HIDDEN * 4       # f32 intermediates / accumulators
           + 2 * (D + 2 * HIDDEN) * HIDDEN * 2   # bf16 weights
           + 8 * HIDDEN * 4)               # f32 biases
    vmem_limit = int(min(64 << 20, max(32 << 20, 2 * est)))

    out = pl.pallas_call(
        simple_nn_kernel,
        out_shape=jax.ShapeDtypeStruct((1, B), jnp.float32),
        grid=(num_tiles,),
        in_specs=in_specs,
        out_specs=out_specs,
        compiler_params=pltpu.CompilerParams(
            dimension_semantics=("parallel",),   # shard batch tiles across TCs (v7x)
            vmem_limit_bytes=vmem_limit,
        ),
    )(x_bf16, *folded)

    return out.reshape(B, 1)


# --------------------------------------------------------------------------------------
# Deterministic init + references
# --------------------------------------------------------------------------------------
def init_params(key, input_dim, hidden=HIDDEN):
    """Deterministic parameter init. Linear weights stored as [in, out]."""
    ks = jax.random.split(key, 16)

    def linear(kw, kb, din, dout):
        lim = 1.0 / jnp.sqrt(din)
        w = jax.random.uniform(kw, (din, dout), jnp.float32, -lim, lim)
        b = jax.random.uniform(kb, (1, dout), jnp.float32, -lim, lim)
        return w, b

    def bn(kg, kb, dim):
        g = 1.0 + 0.1 * jax.random.normal(kg, (1, dim), jnp.float32)
        beta = 0.1 * jax.random.normal(kb, (1, dim), jnp.float32)
        mean = 0.05 * jax.random.normal(jax.random.fold_in(kg, 1), (1, dim), jnp.float32)
        var = 1.0 + 0.1 * jax.random.uniform(jax.random.fold_in(kb, 1), (1, dim), jnp.float32)
        return g, beta, mean, var

    w1, b1 = linear(ks[0], ks[1], input_dim, hidden)
    g1, be1, m1, v1 = bn(ks[2], ks[3], hidden)
    w2, b2 = linear(ks[4], ks[5], hidden, hidden)
    g2, be2, m2, v2 = bn(ks[6], ks[7], hidden)
    w3, b3 = linear(ks[8], ks[9], hidden, hidden)
    g3, be3, m3, v3 = bn(ks[10], ks[11], hidden)
    w4, b4 = linear(ks[12], ks[13], hidden, 1)

    return (w1, b1, g1, be1, m1, v1,
            w2, b2, g2, be2, m2, v2,
            w3, b3, g3, be3, m3, v3,
            w4, b4)


def reference_forward_f32(x, params):
    """Pure-f32 reference matching PyTorch eval-mode semantics (no BN fold, no bf16)."""
    (w1, b1, g1, be1, m1, v1,
     w2, b2, g2, be2, m2, v2,
     w3, b3, g3, be3, m3, v3,
     w4, b4) = params

    def layer(h, w, b, g, be, m, v):
        z = h @ w + b
        z = (z - m) * jax.lax.rsqrt(v + EPS) * g + be
        return jnp.where(z > 0, z, NEG_SLOPE * z)

    h = layer(x, w1, b1, g1, be1, m1, v1)
    h = layer(h, w2, b2, g2, be2, m2, v2)
    h = layer(h, w3, b3, g3, be3, m3, v3)
    return h @ w4 + b4


def reference_forward_folded(x, folded):
    """Reference mirroring the kernel arithmetic (BN folded, bf16 matmul operands)."""
    (w1f, b1f, w2f, b2f, w3f, b3f, w4_row, b4) = folded

    def layer(h, w, b):
        z = jnp.dot(h.astype(jnp.bfloat16), w, preferred_element_type=jnp.float32) + b
        return jnp.where(z > 0, z, NEG_SLOPE * z)

    h = layer(x, w1f, b1f)
    h = layer(h, w2f, b2f)
    h = layer(h, w3f, b3f)
    return jnp.sum(h * w4_row, axis=-1, keepdims=True) + b4


# --------------------------------------------------------------------------------------
if __name__ == "__main__":
    B, INPUT_DIM = 256, 32   # small deterministic example -> 2 batch tiles of 128
    key = jax.random.PRNGKey(0)
    kx, kp = jax.random.split(key)
    x = jax.random.normal(kx, (B, INPUT_DIM), jnp.float32)
    params = init_params(kp, INPUT_DIM)

    # Fold BN + bf16-cast weights once, outside the hot per-call path.
    folded = fold_params(params)

    fwd = jax.jit(simple_nn_forward, static_argnames=("max_tile_b",))
    out = jax.block_until_ready(fwd(x, folded))
    assert out.shape == (B, 1)

    # Tight check vs a reference that mirrors the kernel math (bf16 matmuls, folded BN).
    ref_folded = reference_forward_folded(x, folded)
    assert jnp.allclose(out, ref_folded, atol=2e-3, rtol=2e-3), "mismatch vs folded ref"

    # Loose sanity check vs the exact f32 PyTorch-eval-mode math (bf16 rounding allowed).
    ref_f32 = reference_forward_f32(x, params)
    assert jnp.allclose(out, ref_f32, atol=2e-1, rtol=2e-1), "mismatch vs f32 ref"

    print("KERNEL_OK")
</pallas_src>

<mosaic_0001>
module attributes {stable_mosaic.version = 11 : i64} {
  func.func @simple_nn_kernel(%arg0: i32, %arg1: memref<128x32xbf16, #tpu.memory_space<vmem>>, %arg2: memref<32x128xbf16, #tpu.memory_space<vmem>>, %arg3: memref<1x128xf32, #tpu.memory_space<vmem>>, %arg4: memref<128x128xbf16, #tpu.memory_space<vmem>>, %arg5: memref<1x128xf32, #tpu.memory_space<vmem>>, %arg6: memref<128x128xbf16, #tpu.memory_space<vmem>>, %arg7: memref<1x128xf32, #tpu.memory_space<vmem>>, %arg8: memref<1x128xf32, #tpu.memory_space<vmem>>, %arg9: memref<1x1xf32, #tpu.memory_space<vmem>>, %arg10: memref<1x128xf32, #tpu.memory_space<vmem>>) attributes {dimension_semantics = [#tpu.dimension_semantics<parallel>], iteration_bounds = array<i64: 2>, scalar_prefetch = 0 : i64, scratch_operands = 0 : i64, tpu.core_type = #tpu.core_type<tc>, window_params = [{transform_indices = @transform_0, window_bounds = array<i64: 128, 32>}, {pipeline_mode = #tpu.pipeline_mode<synchronous>, transform_indices = @transform_1, window_bounds = array<i64: 32, 128>}, {pipeline_mode = #tpu.pipeline_mode<synchronous>, transform_indices = @transform_2, window_bounds = array<i64: 1, 128>}, {pipeline_mode = #tpu.pipeline_mode<synchronous>, transform_indices = @transform_3, window_bounds = array<i64: 128, 128>}, {pipeline_mode = #tpu.pipeline_mode<synchronous>, transform_indices = @transform_4, window_bounds = array<i64: 1, 128>}, {pipeline_mode = #tpu.pipeline_mode<synchronous>, transform_indices = @transform_5, window_bounds = array<i64: 128, 128>}, {pipeline_mode = #tpu.pipeline_mode<synchronous>, transform_indices = @transform_6, window_bounds = array<i64: 1, 128>}, {pipeline_mode = #tpu.pipeline_mode<synchronous>, transform_indices = @transform_7, window_bounds = array<i64: 1, 128>}, {pipeline_mode = #tpu.pipeline_mode<synchronous>, transform_indices = @transform_8, window_bounds = array<i64: 1, 1>}, {transform_indices = @transform_9, window_bounds = array<i64: 1, 128>}]} {
    %c0 = arith.constant 0 : index
    %c0_0 = arith.constant 0 : index
    %0 = vector.load %arg1[%c0, %c0_0] : memref<128x32xbf16, #tpu.memory_space<vmem>>, vector<128x32xbf16>
    %c0_1 = arith.constant 0 : index
    %c0_2 = arith.constant 0 : index
    %1 = vector.load %arg2[%c0_1, %c0_2] : memref<32x128xbf16, #tpu.memory_space<vmem>>, vector<32x128xbf16>
    %cst = arith.constant dense<0.000000e+00> : vector<128x128xf32>
    %2 = tpu.matmul %0, %1, %cst {dimension_numbers = #tpu.dot_dimension_numbers<[1], [0], [0], [1], [0, 0, 1, 1], [], []>} : vector<128x32xbf16>, vector<32x128xbf16>, vector<128x128xf32> -> vector<128x128xf32>
    %c0_3 = arith.constant 0 : index
    %c0_4 = arith.constant 0 : index
    %3 = vector.load %arg3[%c0_3, %c0_4] : memref<1x128xf32, #tpu.memory_space<vmem>>, vector<1x128xf32>
    %4 = vector.broadcast %3 : vector<1x128xf32> to vector<128x128xf32>
    %5 = arith.addf %2, %4 : vector<128x128xf32>
    %cst_5 = arith.constant 0.000000e+00 : f32
    %6 = vector.broadcast %cst_5 : f32 to vector<128x128xf32>
    %7 = arith.cmpf ogt, %5, %6 : vector<128x128xf32>
    %cst_6 = arith.constant 0.00999999977 : f32
    %8 = vector.broadcast %cst_6 : f32 to vector<128x128xf32>
    %9 = arith.mulf %8, %5 : vector<128x128xf32>
    %10 = arith.select %7, %5, %9 : vector<128x128xi1>, vector<128x128xf32>
    %11 = arith.truncf %10 : vector<128x128xf32> to vector<128x128xbf16>
    %c0_7 = arith.constant 0 : index
    %c0_8 = arith.constant 0 : index
    %12 = vector.load %arg4[%c0_7, %c0_8] : memref<128x128xbf16, #tpu.memory_space<vmem>>, vector<128x128xbf16>
    %cst_9 = arith.constant dense<0.000000e+00> : vector<128x128xf32>
    %13 = tpu.matmul %11, %12, %cst_9 {dimension_numbers = #tpu.dot_dimension_numbers<[1], [0], [0], [1], [0, 0, 1, 1], [], []>} : vector<128x128xbf16>, vector<128x128xbf16>, vector<128x128xf32> -> vector<128x128xf32>
    %c0_10 = arith.constant 0 : index
    %c0_11 = arith.constant 0 : index
    %14 = vector.load %arg5[%c0_10, %c0_11] : memref<1x128xf32, #tpu.memory_space<vmem>>, vector<1x128xf32>
    %15 = vector.broadcast %14 : vector<1x128xf32> to vector<128x128xf32>
    %16 = arith.addf %13, %15 : vector<128x128xf32>
    %cst_12 = arith.constant 0.000000e+00 : f32
    %17 = vector.broadcast %cst_12 : f32 to vector<128x128xf32>
    %18 = arith.cmpf ogt, %16, %17 : vector<128x128xf32>
    %cst_13 = arith.constant 0.00999999977 : f32
    %19 = vector.broadcast %cst_13 : f32 to vector<128x128xf32>
    %20 = arith.mulf %19, %16 : vector<128x128xf32>
    %21 = arith.select %18, %16, %20 : vector<128x128xi1>, vector<128x128xf32>
    %22 = arith.truncf %21 : vector<128x128xf32> to vector<128x128xbf16>
    %c0_14 = arith.constant 0 : index
    %c0_15 = arith.constant 0 : index
    %23 = vector.load %arg6[%c0_14, %c0_15] : memref<128x128xbf16, #tpu.memory_space<vmem>>, vector<128x128xbf16>
    %cst_16 = arith.constant dense<0.000000e+00> : vector<128x128xf32>
    %24 = tpu.matmul %22, %23, %cst_16 {dimension_numbers = #tpu.dot_dimension_numbers<[1], [0], [0], [1], [0, 0, 1, 1], [], []>} : vector<128x128xbf16>, vector<128x128xbf16>, vector<128x128xf32> -> vector<128x128xf32>
    %c0_17 = arith.constant 0 : index
    %c0_18 = arith.constant 0 : index
    %25 = vector.load %arg7[%c0_17, %c0_18] : memref<1x128xf32, #tpu.memory_space<vmem>>, vector<1x128xf32>
    %26 = vector.broadcast %25 : vector<1x128xf32> to vector<128x128xf32>
    %27 = arith.addf %24, %26 : vector<128x128xf32>
    %cst_19 = arith.constant 0.000000e+00 : f32
    %28 = vector.broadcast %cst_19 : f32 to vector<128x128xf32>
    %29 = arith.cmpf ogt, %27, %28 : vector<128x128xf32>
    %cst_20 = arith.constant 0.00999999977 : f32
    %30 = vector.broadcast %cst_20 : f32 to vector<128x128xf32>
    %31 = arith.mulf %30, %27 : vector<128x128xf32>
    %32 = arith.select %29, %27, %31 : vector<128x128xi1>, vector<128x128xf32>
    %c0_21 = arith.constant 0 : index
    %c0_22 = arith.constant 0 : index
    %33 = vector.load %arg8[%c0_21, %c0_22] : memref<1x128xf32, #tpu.memory_space<vmem>>, vector<1x128xf32>
    %34 = vector.broadcast %33 : vector<1x128xf32> to vector<128x128xf32>
    %35 = arith.mulf %32, %34 : vector<128x128xf32>
    %cst_23 = arith.constant dense<0.000000e+00> : vector<128xf32>
    %36 = vector.multi_reduction <add>, %35, %cst_23 [1] : vector<128x128xf32> to vector<128xf32>
    %37 = vector.shape_cast %36 : vector<128xf32> to vector<1x128xf32>
    %c0_24 = arith.constant 0 : index
    %c0_25 = arith.constant 0 : index
    %38 = vector.load %arg9[%c0_24, %c0_25] : memref<1x1xf32, #tpu.memory_space<vmem>>, vector<1x1xf32>
    %39 = vector.broadcast %38 : vector<1x1xf32> to vector<1x128xf32>
    %40 = arith.addf %37, %39 : vector<1x128xf32>
    %c0_26 = arith.constant 0 : index
    %c0_27 = arith.constant 0 : index
    %41 = vector.load %arg10[%c0_26, %c0_27] : memref<1x128xf32, #tpu.memory_space<vmem>>, vector<1x128xf32>
    tpu.vector_store %arg10[%c0_26, %c0_27], %40 {strides = array<i32>} : memref<1x128xf32, #tpu.memory_space<vmem>>, vector<1x128xf32>,
    return
  }
  func.func @transform_0(%arg0: i32) -> (i32, i32) {
    %c0_i32 = arith.constant 0 : i32
    %c0_i32_0 = arith.constant 0 : i32
    return %arg0, %c0_i32 : i32, i32
  }
  func.func @transform_1(%arg0: i32) -> (i32, i32) {
    %c0_i32 = arith.constant 0 : i32
    %c0_i32_0 = arith.constant 0 : i32
    %c0_i32_1 = arith.constant 0 : i32
    return %c0_i32, %c0_i32_0 : i32, i32
  }
  func.func @transform_2(%arg0: i32) -> (i32, i32) {
    %c0_i32 = arith.constant 0 : i32
    %c0_i32_0 = arith.constant 0 : i32
    %c0_i32_1 = arith.constant 0 : i32
    return %c0_i32, %c0_i32_0 : i32, i32
  }
  func.func @transform_3(%arg0: i32) -> (i32, i32) {
    %c0_i32 = arith.constant 0 : i32
    %c0_i32_0 = arith.constant 0 : i32
    %c0_i32_1 = arith.constant 0 : i32
    return %c0_i32, %c0_i32_0 : i32, i32
  }
  func.func @transform_4(%arg0: i32) -> (i32, i32) {
    %c0_i32 = arith.constant 0 : i32
    %c0_i32_0 = arith.constant 0 : i32
    %c0_i32_1 = arith.constant 0 : i32
    return %c0_i32, %c0_i32_0 : i32, i32
  }
  func.func @transform_5(%arg0: i32) -> (i32, i32) {
    %c0_i32 = arith.constant 0 : i32
    %c0_i32_0 = arith.constant 0 : i32
    %c0_i32_1 = arith.constant 0 : i32
    return %c0_i32, %c0_i32_0 : i32, i32
  }
  func.func @transform_6(%arg0: i32) -> (i32, i32) {
    %c0_i32 = arith.constant 0 : i32
    %c0_i32_0 = arith.constant 0 : i32
    %c0_i32_1 = arith.constant 0 : i32
    return %c0_i32, %c0_i32_0 : i32, i32
  }
  func.func @transform_7(%arg0: i32) -> (i32, i32) {
    %c0_i32 = arith.constant 0 : i32
    %c0_i32_0 = arith.constant 0 : i32
    %c0_i32_1 = arith.constant 0 : i32
    return %c0_i32, %c0_i32_0 : i32, i32
  }
  func.func @transform_8(%arg0: i32) -> (i32, i32) {
    %c0_i32 = arith.constant 0 : i32
    %c0_i32_0 = arith.constant 0 : i32
    %c0_i32_1 = arith.constant 0 : i32
    return %c0_i32, %c0_i32_0 : i32, i32
  }
  func.func @transform_9(%arg0: i32) -> (i32, i32) {
    %c0_i32 = arith.constant 0 : i32
    %c0_i32_0 = arith.constant 0 : i32
    return %c0_i32, %arg0 : i32, i32
  }
}

</mosaic_0001>

<llo_original>
// kernel: simple_nn_forward.1
$region0: #{simple_nn_forward.1}
  #allocation0 [shape = 'u32[]', space=smem, size = 0x4, offset = 0x4, fixed_abs, tag = 'smem constant byte address 0x4 - core index']
  #allocation1 [shape = 'u32[72,128]{1,0:T(1,128)}', space=vmem, size = 0x9000, scoped, tag = 'internal scratch']
  #allocation2 [shape = 'f32[1,1]{1,0:T(1,128)S(1)}', space=vmem, size = 0x200, scoped, tag = 'scoped memory for simple_nn_forward.1']
  %s0 = inlined_call_operand.vmem [shape: bf16[256,32], index: 0, kind: input, shape index: {}]
  %s1 = inlined_call_operand.vmem [shape: bf16[32,128], index: 1, kind: input, shape index: {}]
  %s2 = inlined_call_operand.vmem [shape: f32[1,128], index: 2, kind: input, shape index: {}]
  %s3 = inlined_call_operand.vmem [shape: bf16[128,128], index: 3, kind: input, shape index: {}]
  %s4 = inlined_call_operand.vmem [shape: f32[1,128], index: 4, kind: input, shape index: {}]
  %s5 = inlined_call_operand.vmem [shape: bf16[128,128], index: 5, kind: input, shape index: {}]
  %s6 = inlined_call_operand.vmem [shape: f32[1,128], index: 6, kind: input, shape index: {}]
  %s7 = inlined_call_operand.vmem [shape: f32[1,128], index: 7, kind: input, shape index: {}]
  %s8 = inlined_call_operand.<no memory space> [shape: f32[1,1], index: 8, kind: input, shape index: {}]
  %s9 = inlined_call_operand.hbm [shape: f32[1,256], index: 9, kind: output, shape index: {}]
  %s10 = sld [smem:[#allocation0]]
  $region69: #{simple_nn_forward.1} parent=0
    _
  %s12 = ssub.s32 1, %s10
  %s13 = scalar_select 0, %s12, %s10
  %v14 = vstv %s8
  %15 = vst [vmem:[#allocation2] sm:$0x1] %v14
  $region1: #{simple_nn_forward.1} parent=0
    #allocation3 [shape = 'u8[1024]{0}', space=vmem, size = 0x400, scoped, tag = 'output window, operand 0']
    #allocation4 [shape = 's32[2]{0}', space=sflag, size = 0x8, scoped, tag = 'scoped memory for simple_nn_forward.1']
    %16 = vsyncpa [#allocation4], 0
    %s17 = scalar_lea.sflag [#allocation4], 1
    %18 = vsyncpa %s17, 0
    loop: start=0, step=1, limit=4
    $region2: #{simple_nn_forward.1} parent=1 // loop_pre_header
      _
    $region3: #{simple_nn_forward.1} parent=1 // loop_header
      %s20 = sphi 0, %s24
      %p21 = scmp.ge.s32.totalorder %s20, 4
      %s30 = sphi 0, %s32
      %s33 = sphi 0, %s30
      %s34 = sphi 0, %s33
      %s50 = sphi 0, %s34
      %s54 = sphi 0, %s54
      %s56 = sphi 0, %s54
      %s57 = sphi 0, %s56
      %s71 = sphi 0, %s57
      %s75 = sphi 0, %s75
      %s77 = sphi 0, %s75
      %s78 = sphi 0, %s77
      %s92 = sphi 0, %s78
      %s96 = sphi 0, %s96
      %s98 = sphi 0, %s96
      %s99 = sphi 0, %s98
      %s113 = sphi 0, %s99
      %s117 = sphi 0, %s117
      %s119 = sphi 0, %s117
      %s120 = sphi 0, %s119
      %s134 = sphi 0, %s120
      %s138 = sphi 0, %s138
      %s140 = sphi 0, %s138
      %s141 = sphi 0, %s140
      %s155 = sphi 0, %s141
      %s159 = sphi 0, %s159
      %s161 = sphi 0, %s159
      %s162 = sphi 0, %s161
      %s176 = sphi 0, %s162
      %s180 = sphi 0, %s180
      %s182 = sphi 0, %s180
      %s183 = sphi 0, %s182
      %s197 = sphi 0, %s183
      %s201 = sphi 0, %s201
      %s203 = sphi 0, %s201
      %s204 = sphi 0, %s203
      %s218 = sphi 0, %s204
      %s224 = sphi 0, %s226
      %s227 = sphi 0, %s224
      %s228 = sphi 0, %s227
      %s244 = sphi 0, %s228
    $region4: #{simple_nn_forward.1} parent=1 // loop_header_branch
      %23 = sbr.rel (%p21) target = $region8
    $region5: #{simple_nn_forward.1} parent=1 // loop_body
      %s25 = ssub.s32 %s20, 1
      %s26 = ssub.s32 %s20, 2
      %s27 = sadd.s32 %s20, 1
      %s28 = ssub.s32 %s20, %s27
      %p29 = scmp.eq.s32.totalorder %s28, 0
      %s31 = sadd.s32 %s30, 1
      %s32 = scalar_select %p29, %s30, %s31
      %p35 = pneg %p29
      %p36 = scmp.eq.s32.totalorder %s20, 1
      %p37 = por %p35, %p36
      %p38 = scmp.ne.s32.totalorder %s30, %s33
      %p39 = scmp.eq.s32.totalorder %s20, 0
      %p40 = por %p38, %p39
      %p41 = scmp.ne.s32.totalorder %s30, %s33
      %p42 = scmp.eq.s32.totalorder %s25, 1
      %p43 = por %p41, %p42
      %p44 = scmp.ne.s32.totalorder %s33, %s34
      %p45 = scmp.eq.s32.totalorder %s25, 0
      %p46 = por %p44, %p45
      %p47 = scmp.ne.s32.totalorder %s33, %s34
      %p48 = scmp.eq.s32.totalorder %s26, 1
      %p49 = por %p47, %p48
      %p51 = scmp.ne.s32.totalorder %s34, %s50
      %p52 = scmp.eq.s32.totalorder %s26, 0
      %p53 = por %p51, %p52
      %s55 = sadd.s32 %s54, 1
      %p58 = scmp.eq.s32.totalorder %s20, 1
      %p59 = scmp.ne.s32.totalorder %s54, %s56
      %p60 = scmp.eq.s32.totalorder %s20, 0
      %p61 = por %p59, %p60
      %p62 = scmp.ne.s32.totalorder %s54, %s56
      %p63 = scmp.eq.s32.totalorder %s25, 1
      %p64 = por %p62, %p63
      %p65 = scmp.ne.s32.totalorder %s56, %s57
      %p66 = scmp.eq.s32.totalorder %s25, 0
      %p67 = por %p65, %p66
      %p68 = scmp.ne.s32.totalorder %s56, %s57
      %p69 = scmp.eq.s32.totalorder %s26, 1
      %p70 = por %p68, %p69
      %p72 = scmp.ne.s32.totalorder %s57, %s71
      %p73 = scmp.eq.s32.totalorder %s26, 0
      %p74 = por %p72, %p73
      %s76 = sadd.s32 %s75, 1
      %p79 = scmp.eq.s32.totalorder %s20, 1
      %p80 = scmp.ne.s32.totalorder %s75, %s77
      %p81 = scmp.eq.s32.totalorder %s20, 0
      %p82 = por %p80, %p81
      %p83 = scmp.ne.s32.totalorder %s75, %s77
      %p84 = scmp.eq.s32.totalorder %s25, 1
      %p85 = por %p83, %p84
      %p86 = scmp.ne.s32.totalorder %s77, %s78
      %p87 = scmp.eq.s32.totalorder %s25, 0
      %p88 = por %p86, %p87
      %p89 = scmp.ne.s32.totalorder %s77, %s78
      %p90 = scmp.eq.s32.totalorder %s26, 1
      %p91 = por %p89, %p90
      %p93 = scmp.ne.s32.totalorder %s78, %s92
      %p94 = scmp.eq.s32.totalorder %s26, 0
      %p95 = por %p93, %p94
      %s97 = sadd.s32 %s96, 1
      %p100 = scmp.eq.s32.totalorder %s20, 1
      %p101 = scmp.ne.s32.totalorder %s96, %s98
      %p102 = scmp.eq.s32.totalorder %s20, 0
      %p103 = por %p101, %p102
      %p104 = scmp.ne.s32.totalorder %s96, %s98
      %p105 = scmp.eq.s32.totalorder %s25, 1
      %p106 = por %p104, %p105
      %p107 = scmp.ne.s32.totalorder %s98, %s99
      %p108 = scmp.eq.s32.totalorder %s25, 0
      %p109 = por %p107, %p108
      %p110 = scmp.ne.s32.totalorder %s98, %s99
      %p111 = scmp.eq.s32.totalorder %s26, 1
      %p112 = por %p110, %p111
      %p114 = scmp.ne.s32.totalorder %s99, %s113
      %p115 = scmp.eq.s32.totalorder %s26, 0
      %p116 = por %p114, %p115
      %s118 = sadd.s32 %s117, 1
      %p121 = scmp.eq.s32.totalorder %s20, 1
      %p122 = scmp.ne.s32.totalorder %s117, %s119
      %p123 = scmp.eq.s32.totalorder %s20, 0
      %p124 = por %p122, %p123
      %p125 = scmp.ne.s32.totalorder %s117, %s119
      %p126 = scmp.eq.s32.totalorder %s25, 1
      %p127 = por %p125, %p126
      %p128 = scmp.ne.s32.totalorder %s119, %s120
      %p129 = scmp.eq.s32.totalorder %s25, 0
      %p130 = por %p128, %p129
      %p131 = scmp.ne.s32.totalorder %s119, %s120
      %p132 = scmp.eq.s32.totalorder %s26, 1
      %p133 = por %p131, %p132
      %p135 = scmp.ne.s32.totalorder %s120, %s134
      %p136 = scmp.eq.s32.totalorder %s26, 0
      %p137 = por %p135, %p136
      %s139 = sadd.s32 %s138, 1
      %p142 = scmp.eq.s32.totalorder %s20, 1
      %p143 = scmp.ne.s32.totalorder %s138, %s140
      %p144 = scmp.eq.s32.totalorder %s20, 0
      %p145 = por %p143, %p144
      %p146 = scmp.ne.s32.totalorder %s138, %s140
      %p147 = scmp.eq.s32.totalorder %s25, 1
      %p148 = por %p146, %p147
      %p149 = scmp.ne.s32.totalorder %s140, %s141
      %p150 = scmp.eq.s32.totalorder %s25, 0
      %p151 = por %p149, %p150
      %p152 = scmp.ne.s32.totalorder %s140, %s141
      %p153 = scmp.eq.s32.totalorder %s26, 1
      %p154 = por %p152, %p153
      %p156 = scmp.ne.s32.totalorder %s141, %s155
      %p157 = scmp.eq.s32.totalorder %s26, 0
      %p158 = por %p156, %p157
      %s160 = sadd.s32 %s159, 1
      %p163 = scmp.eq.s32.totalorder %s20, 1
      %p164 = scmp.ne.s32.totalorder %s159, %s161
      %p165 = scmp.eq.s32.totalorder %s20, 0
      %p166 = por %p164, %p165
      %p167 = scmp.ne.s32.totalorder %s159, %s161
      %p168 = scmp.eq.s32.totalorder %s25, 1
      %p169 = por %p167, %p168
      %p170 = scmp.ne.s32.totalorder %s161, %s162
      %p171 = scmp.eq.s32.totalorder %s25, 0
      %p172 = por %p170, %p171
      %p173 = scmp.ne.s32.totalorder %s161, %s162
      %p174 = scmp.eq.s32.totalorder %s26, 1
      %p175 = por %p173, %p174
      %p177 = scmp.ne.s32.totalorder %s162, %s176
      %p178 = scmp.eq.s32.totalorder %s26, 0
      %p179 = por %p177, %p178
      %s181 = sadd.s32 %s180, 1
      %p184 = scmp.eq.s32.totalorder %s20, 1
      %p185 = scmp.ne.s32.totalorder %s180, %s182
      %p186 = scmp.eq.s32.totalorder %s20, 0
      %p187 = por %p185, %p186
      %p188 = scmp.ne.s32.totalorder %s180, %s182
      %p189 = scmp.eq.s32.totalorder %s25, 1
      %p190 = por %p188, %p189
      %p191 = scmp.ne.s32.totalorder %s182, %s183
      %p192 = scmp.eq.s32.totalorder %s25, 0
      %p193 = por %p191, %p192
      %p194 = scmp.ne.s32.totalorder %s182, %s183
      %p195 = scmp.eq.s32.totalorder %s26, 1
      %p196 = por %p194, %p195
      %p198 = scmp.ne.s32.totalorder %s183, %s197
      %p199 = scmp.eq.s32.totalorder %s26, 0
      %p200 = por %p198, %p199
      %s202 = sadd.s32 %s201, 1
      %p205 = scmp.eq.s32.totalorder %s20, 1
      %p206 = scmp.ne.s32.totalorder %s201, %s203
      %p207 = scmp.eq.s32.totalorder %s20, 0
      %p208 = por %p206, %p207
      %p209 = scmp.ne.s32.totalorder %s201, %s203
      %p210 = scmp.eq.s32.totalorder %s25, 1
      %p211 = por %p209, %p210
      %p212 = scmp.ne.s32.totalorder %s203, %s204
      %p213 = scmp.eq.s32.totalorder %s25, 0
      %p214 = por %p212, %p213
      %p215 = scmp.ne.s32.totalorder %s203, %s204
      %p216 = scmp.eq.s32.totalorder %s26, 1
      %p217 = por %p215, %p216
      %p219 = scmp.ne.s32.totalorder %s204, %s218
      %p220 = scmp.eq.s32.totalorder %s26, 0
      %p221 = por %p219, %p220
      %s222 = ssub.s32 %s20, %s27
      %p223 = scmp.eq.s32.totalorder %s222, 0
      %s225 = sadd.s32 %s224, 1
      %s226 = scalar_select %p223, %s224, %s225
      %p229 = pneg %p223
      %p230 = scmp.eq.s32.totalorder %s20, 1
      %p231 = por %p229, %p230
      %p232 = scmp.ne.s32.totalorder %s224, %s227
      %p233 = scmp.eq.s32.totalorder %s20, 0
      %p234 = por %p232, %p233
      %p235 = scmp.ne.s32.totalorder %s224, %s227
      %p236 = scmp.eq.s32.totalorder %s25, 1
      %p237 = por %p235, %p236
      %p238 = scmp.ne.s32.totalorder %s227, %s228
      %p239 = scmp.eq.s32.totalorder %s25, 0
      %p240 = por %p238, %p239
      %p241 = scmp.ne.s32.totalorder %s227, %s228
      %p242 = scmp.eq.s32.totalorder %s26, 1
      %p243 = por %p241, %p242
      %p245 = scmp.ne.s32.totalorder %s228, %s244
      %p246 = scmp.eq.s32.totalorder %s26, 0
      %p247 = por %p245, %p246
      %p248 = scmp.le.s32.totalorder 1, %s20
      %p249 = scmp.lt.s32.totalorder %s20, 3
      %p250 = pnand %p248, %p249
      %p251 = pneg %p250
      // Predicated region
      $region9: #{simple_nn_forward.1} parent=5 // pred_check
        _
      $region10: #{simple_nn_forward.1} parent=5 // pred_check_branch
        %253 = sbr.rel (%p250) target = $region12
      $region11: #{simple_nn_forward.1} parent=5 // pred_region
        %s254 = ssub.s32 %s20, 1
        // Predicated region
        $region13: #{simple_nn_forward.1} parent=11 // pred_check
          %p255 = pneg %p67
        $region14: #{simple_nn_forward.1} parent=11 // pred_check_branch
          %257 = sbr.rel (%p255) target = $region16
        $region15: #{simple_nn_forward.1} parent=11 // pred_region
          _
        $region16: #{simple_nn_forward.1} parent=11 // pred_fallthru
          _
        // Predicated region
        $region17: #{simple_nn_forward.1} parent=11 // pred_check
          %p258 = pneg %p88
        $region18: #{simple_nn_forward.1} parent=11 // pred_check_branch
          %260 = sbr.rel (%p258) target = $region20
        $region19: #{simple_nn_forward.1} parent=11 // pred_region
          _
        $region20: #{simple_nn_forward.1} parent=11 // pred_fallthru
          _
        // Predicated region
        $region21: #{simple_nn_forward.1} parent=11 // pred_check
          %p261 = pneg %p109
        $region22: #{simple_nn_forward.1} parent=11 // pred_check_branch
          %263 = sbr.rel (%p261) target = $region24
        $region23: #{simple_nn_forward.1} parent=11 // pred_region
          _
        $region24: #{simple_nn_forward.1} parent=11 // pred_fallthru
          _
        // Predicated region
        $region25: #{simple_nn_forward.1} parent=11 // pred_check
          %p264 = pneg %p130
        $region26: #{simple_nn_forward.1} parent=11 // pred_check_branch
          %266 = sbr.rel (%p264) target = $region28
        $region27: #{simple_nn_forward.1} parent=11 // pred_region
          _
        $region28: #{simple_nn_forward.1} parent=11 // pred_fallthru
          _
        // Predicated region
        $region29: #{simple_nn_forward.1} parent=11 // pred_check
          %p267 = pneg %p151
        $region30: #{simple_nn_forward.1} parent=11 // pred_check_branch
          %269 = sbr.rel (%p267) target = $region32
        $region31: #{simple_nn_forward.1} parent=11 // pred_region
          _
        $region32: #{simple_nn_forward.1} parent=11 // pred_fallthru
          _
        // Predicated region
        $region33: #{simple_nn_forward.1} parent=11 // pred_check
          %p270 = pneg %p172
        $region34: #{simple_nn_forward.1} parent=11 // pred_check_branch
          %272 = sbr.rel (%p270) target = $region36
        $region35: #{simple_nn_forward.1} parent=11 // pred_region
          _
        $region36: #{simple_nn_forward.1} parent=11 // pred_fallthru
          _
        // Predicated region
        $region37: #{simple_nn_forward.1} parent=11 // pred_check
          %p273 = pneg %p193
        $region38: #{simple_nn_forward.1} parent=11 // pred_check_branch
          %275 = sbr.rel (%p273) target = $region40
        $region39: #{simple_nn_forward.1} parent=11 // pred_region
          _
        $region40: #{simple_nn_forward.1} parent=11 // pred_fallthru
          _
        // Predicated region
        $region41: #{simple_nn_forward.1} parent=11 // pred_check
          %p276 = pneg %p214
        $region42: #{simple_nn_forward.1} parent=11 // pred_check_branch
          %278 = sbr.rel (%p276) target = $region44
        $region43: #{simple_nn_forward.1} parent=11 // pred_region
          _
        $region44: #{simple_nn_forward.1} parent=11 // pred_fallthru
          _
      $region12: #{simple_nn_forward.1} parent=5 // pred_fallthru
        _
      %p279 = scmp.lt.s32.totalorder %s20, 2
      // Predicated region
      $region45: #{simple_nn_forward.1} parent=5 // pred_check
        %p280 = pneg %p279
      $region46: #{simple_nn_forward.1} parent=5 // pred_check_branch
        %282 = sbr.rel (%p280) target = $region48
      $region47: #{simple_nn_forward.1} parent=5 // pred_region
        // Predicated region
        $region49: #{simple_nn_forward.1} parent=47 // pred_check
          %p283 = pneg %p40
        $region50: #{simple_nn_forward.1} parent=47 // pred_check_branch
          %285 = sbr.rel (%p283) target = $region52
        $region51: #{simple_nn_forward.1} parent=47 // pred_region
          %s286 = smul.u32 16, %s20
          %p287 = scmp.lt.s32.totalorder %s286, 31
          %s288 = scalar_select %p287, %s286, 31
          %s289 = smul.addr %s288, 4
          %s290 = scalar_lea.vmem %s0, %s289
          %s291 = smul.u32 16, %s20
        $region52: #{simple_nn_forward.1} parent=47 // pred_fallthru
          _
      $region48: #{simple_nn_forward.1} parent=5 // pred_fallthru
        _
      %p292 = scmp.le.s32.totalorder 1, %s20
      %p293 = scmp.lt.s32.totalorder %s20, 3
      %p294 = pnand %p292, %p293
      %p295 = pneg %p294
      // Predicated region
      $region53: #{simple_nn_forward.1} parent=5 // pred_check
        _
      $region54: #{simple_nn_forward.1} parent=5 // pred_check_branch
        %297 = sbr.rel (%p294) target = $region56
      $region55: #{simple_nn_forward.1} parent=5 // pred_region
        %s298 = ssub.s32 %s20, 1
        %s299 = smul.u32 16, %s25
        %p300 = scmp.lt.s32.totalorder %s299, 31
        %s301 = scalar_select %p300, %s299, 31
        %s302 = smul.addr %s301, 4
        %s303 = scalar_lea.vmem %s0, %s302
        %p304 = pneg %p46
        %p305 = pneg %p43
        %p306 = pneg %p67
        %p307 = pneg %p64
        %p308 = pneg %p88
        %p309 = pneg %p85
        %p310 = pneg %p109
        %p311 = pneg %p106
        %p312 = pneg %p130
        %p313 = pneg %p127
        %p314 = pneg %p151
        %p315 = pneg %p148
        %p316 = pneg %p172
        %p317 = pneg %p169
        %p318 = pneg %p193
        %p319 = pneg %p190
        %p320 = pneg %p214
        %p321 = pneg %p211
        %p322 = pneg %p240
        %p323 = pneg %p237
        %s324 = sand.u32 %s227, 1
        %s325 = scalar_lea.sflag [#allocation4], %s324
        %s326 = sand.u32 %s227, 1
        %s327 = scalar_lea.vmem [#allocation3], %s326
        %s328 = smul.u32 16, %s25
        %p329 = scmp.lt.s32.totalorder %s328, 31
        %s330 = scalar_select %p329, %s328, 31
        %s331 = smul.addr %s330, 4
        %s332 = scalar_lea.vmem %s0, %s331
        %s333 = smul.u32 16, %s25
        %v335 = vld [vmem:[%s332] sm:$0xf]
        %v336 = vld [vmem:[%s332 + $0x4] sm:$0xf]
        %v337 = vld [vmem:[%s332 + $0x8] sm:$0xf]
        %v338 = vld [vmem:[%s332 + $0xc] sm:$0xf]
        %v339 = vld [vmem:[%s332 + $0x10] sm:$0xf]
        %v340 = vld [vmem:[%s332 + $0x14] sm:$0xf]
        %v341 = vld [vmem:[%s332 + $0x18] sm:$0xf]
        %v342 = vld [vmem:[%s332 + $0x1c] sm:$0xf]
        %v343 = vld [vmem:[%s332 + $0x20] sm:$0xf]
        %v344 = vld [vmem:[%s332 + $0x24] sm:$0xf]
        %v345 = vld [vmem:[%s332 + $0x28] sm:$0xf]
        %v346 = vld [vmem:[%s332 + $0x2c] sm:$0xf]
        %v347 = vld [vmem:[%s332 + $0x30] sm:$0xf]
        %v348 = vld [vmem:[%s332 + $0x34] sm:$0xf]
        %v349 = vld [vmem:[%s332 + $0x38] sm:$0xf]
        %v350 = vld [vmem:[%s332 + $0x3c] sm:$0xf]
        %v351 = vld [vmem:[%s1] sm:$0xf]
        %v352 = vld [vmem:[%s1 + $0x4] sm:$0xf]
        %v353 = vld [vmem:[%s1 + $0x8] sm:$0xf]
        %v354 = vld [vmem:[%s1 + $0xc] sm:$0xf]
        %v355 = vld [vmem:[%s2] sm:$0x1]
        %v357 = vperm.slane %v355, 0
        %v375 = vunpack.c.l.b16 %v335
        %v376 = vunpack.c.l.b16 %v336
        %v377 = vunpack.c.l.b16 %v337
        %v378 = vunpack.c.l.b16 %v338
        %v379 = vunpack.c.l.b16 %v339
        %v380 = vunpack.c.l.b16 %v340
        %v381 = vunpack.c.l.b16 %v341
        %v382 = vunpack.c.l.b16 %v342
        %v383 = vunpack.c.l.b16 %v343
        %v384 = vunpack.c.l.b16 %v344
        %v385 = vunpack.c.l.b16 %v345
        %v386 = vunpack.c.l.b16 %v346
        %v387 = vunpack.c.l.b16 %v347
        %v388 = vunpack.c.l.b16 %v348
        %v389 = vunpack.c.l.b16 %v349
        %v390 = vunpack.c.l.b16 %v350
        %v391 = vpack.c.b16 %v376, %v375
        %v392 = vpack.c.b16 %v378, %v377
        %v393 = vpack.c.b16 %v380, %v379
        %v394 = vpack.c.b16 %v382, %v381
        %v395 = vpack.c.b16 %v384, %v383
        %v396 = vpack.c.b16 %v386, %v385
        %v397 = vpack.c.b16 %v388, %v387
        %v398 = vpack.c.b16 %v390, %v389
        %v403 = vunpack.c.l.b16 %v351
        %v404 = vunpack.c.l.b16 %v352
        %v405 = vunpack.c.l.b16 %v353
        %v406 = vunpack.c.l.b16 %v354
        %v407 = vpack.c.b16 %v404, %v403
        %v408 = vpack.c.b16 %v406, %v405
        %vm411 = vcmask 261120
        %v413 = vsel %vm411, %v391, 0
        %v416 = vsel %vm411, %v392, 0
        %v419 = vsel %vm411, %v393, 0
        %v422 = vsel %vm411, %v394, 0
        %v425 = vsel %vm411, %v395, 0
        %v428 = vsel %vm411, %v396, 0
        %v431 = vsel %vm411, %v397, 0
        %v434 = vsel %vm411, %v398, 0
        %436 = vmatpush.bf16.msra.mxu0 0
        %437 = vmatpush.bf16.msra.mxu0 0
        %438 = vmatpush.bf16.msra.mxu0 0
        %439 = vmatpush.bf16.msra.mxu0 0
        %440 = vmatpush.bf16.msra.mxu0 0
        %441 = vmatpush.bf16.msra.mxu0 0
        %442 = vmatpush.bf16.msra.mxu0 %v408
        %443 = vmatpush.bf16.msra.mxu0 %v407
        %444 = vmatmul.bf16.gmra.mxu0 %v413
        %v445 = vpop.f32.mrf.mxu0
        %v446 = vadd.f32 %v357, %v445
        %v447 = vpop.f32.mrf.mxu0
        %v448 = vadd.f32 %v357, %v447
        %449 = vmatmul.bf16.gmra.mxu0 %v416
        %v450 = vpop.f32.mrf.mxu0
        %v451 = vadd.f32 %v357, %v450
        %v452 = vpop.f32.mrf.mxu0
        %v453 = vadd.f32 %v357, %v452
        %454 = vmatmul.bf16.gmra.mxu0 %v419
        %v455 = vpop.f32.mrf.mxu0
        %v456 = vadd.f32 %v357, %v455
        %v457 = vpop.f32.mrf.mxu0
        %v458 = vadd.f32 %v357, %v457
        %459 = vmatmul.bf16.gmra.mxu0 %v422
        %v460 = vpop.f32.mrf.mxu0
        %v461 = vadd.f32 %v357, %v460
        %v462 = vpop.f32.mrf.mxu0
        %v463 = vadd.f32 %v357, %v462
        %464 = vmatmul.bf16.gmra.mxu0 %v425
        %v465 = vpop.f32.mrf.mxu0
        %v466 = vadd.f32 %v357, %v465
        %v467 = vpop.f32.mrf.mxu0
        %v468 = vadd.f32 %v357, %v467
        %469 = vmatmul.bf16.gmra.mxu0 %v428
        %v470 = vpop.f32.mrf.mxu0
        %v471 = vadd.f32 %v357, %v470
        %v472 = vpop.f32.mrf.mxu0
        %v473 = vadd.f32 %v357, %v472
        %474 = vmatmul.bf16.gmra.mxu0 %v431
        %v475 = vpop.f32.mrf.mxu0
        %v476 = vadd.f32 %v357, %v475
        %v477 = vpop.f32.mrf.mxu0
        %v478 = vadd.f32 %v357, %v477
        %479 = vmatmul.bf16.gmra.mxu0 %v434
        %v480 = vpop.f32.mrf.mxu0
        %v481 = vadd.f32 %v357, %v480
        %v482 = vpop.f32.mrf.mxu0
        %v483 = vadd.f32 %v357, %v482
        %484 = vdwg.mxu0
        %vm485 = vcmp.gt.f32.partialorder %v446, 0.0
        %vm486 = vcmp.gt.f32.partialorder %v448, 0.0
        %vm487 = vcmp.gt.f32.partialorder %v451, 0.0
        %vm488 = vcmp.gt.f32.partialorder %v453, 0.0
        %vm489 = vcmp.gt.f32.partialorder %v456, 0.0
        %vm490 = vcmp.gt.f32.partialorder %v458, 0.0
        %vm491 = vcmp.gt.f32.partialorder %v461, 0.0
        %vm492 = vcmp.gt.f32.partialorder %v463, 0.0
        %vm493 = vcmp.gt.f32.partialorder %v466, 0.0
        %vm494 = vcmp.gt.f32.partialorder %v468, 0.0
        %vm495 = vcmp.gt.f32.partialorder %v471, 0.0
        %vm496 = vcmp.gt.f32.partialorder %v473, 0.0
        %vm497 = vcmp.gt.f32.partialorder %v476, 0.0
        %vm498 = vcmp.gt.f32.partialorder %v478, 0.0
        %vm499 = vcmp.gt.f32.partialorder %v481, 0.0
        %vm500 = vcmp.gt.f32.partialorder %v483, 0.0
        %v501 = vmul.f32 %v446, 0.01
        %v502 = vmul.f32 %v448, 0.01
        %v503 = vmul.f32 %v451, 0.01
        %v504 = vmul.f32 %v453, 0.01
        %v505 = vmul.f32 %v456, 0.01
        %v506 = vmul.f32 %v458, 0.01
        %v507 = vmul.f32 %v461, 0.01
        %v508 = vmul.f32 %v463, 0.01
        %v509 = vmul.f32 %v466, 0.01
        %v510 = vmul.f32 %v468, 0.01
        %v511 = vmul.f32 %v471, 0.01
        %v512 = vmul.f32 %v473, 0.01
        %v513 = vmul.f32 %v476, 0.01
        %v514 = vmul.f32 %v478, 0.01
        %v515 = vmul.f32 %v481, 0.01
        %v516 = vmul.f32 %v483, 0.01
        %v517 = vsel %vm485, %v446, %v501
        %v518 = vsel %vm486, %v448, %v502
        %v519 = vsel %vm487, %v451, %v503
        %v520 = vsel %vm488, %v453, %v504
        %v521 = vsel %vm489, %v456, %v505
        %v522 = vsel %vm490, %v458, %v506
        %v523 = vsel %vm491, %v461, %v507
        %v524 = vsel %vm492, %v463, %v508
        %v525 = vsel %vm493, %v466, %v509
        %v526 = vsel %vm494, %v468, %v510
        %v527 = vsel %vm495, %v471, %v511
        %v528 = vsel %vm496, %v473, %v512
        %v529 = vsel %vm497, %v476, %v513
        %v530 = vsel %vm498, %v478, %v514
        %v531 = vsel %vm499, %v481, %v515
        %v532 = vsel %vm500, %v483, %v516
        %v533 = vpack.c.bf16 %v518, %v517
        %v534 = vpack.c.bf16 %v520, %v519
        %v535 = vpack.c.bf16 %v522, %v521
        %v536 = vpack.c.bf16 %v524, %v523
        %v537 = vpack.c.bf16 %v526, %v525
        %v538 = vpack.c.bf16 %v528, %v527
        %v539 = vpack.c.bf16 %v530, %v529
        %v540 = vpack.c.bf16 %v532, %v531
        %v541 = vld [vmem:[%s3] sm:$0xf]
        %v542 = vld [vmem:[%s3 + $0x4] sm:$0xf]
        %v543 = vld [vmem:[%s3 + $0x8] sm:$0xf]
        %v544 = vld [vmem:[%s3 + $0xc] sm:$0xf]
        %v545 = vld [vmem:[%s3 + $0x10] sm:$0xf]
        %v546 = vld [vmem:[%s3 + $0x14] sm:$0xf]
        %v547 = vld [vmem:[%s3 + $0x18] sm:$0xf]
        %v548 = vld [vmem:[%s3 + $0x1c] sm:$0xf]
        %v549 = vld [vmem:[%s3 + $0x20] sm:$0xf]
        %v550 = vld [vmem:[%s3 + $0x24] sm:$0xf]
        %v551 = vld [vmem:[%s3 + $0x28] sm:$0xf]
        %v552 = vld [vmem:[%s3 + $0x2c] sm:$0xf]
        %v553 = vld [vmem:[%s3 + $0x30] sm:$0xf]
        %v554 = vld [vmem:[%s3 + $0x34] sm:$0xf]
        %v555 = vld [vmem:[%s3 + $0x38] sm:$0xf]
        %v556 = vld [vmem:[%s3 + $0x3c] sm:$0xf]
        %v557 = vld [vmem:[%s4] sm:$0x1]
        %v559 = vperm.slane %v557, 0
        %v577 = vunpack.c.l.b16 %v541
        %v578 = vunpack.c.l.b16 %v542
        %v579 = vunpack.c.l.b16 %v543
        %v580 = vunpack.c.l.b16 %v544
        %v581 = vunpack.c.l.b16 %v545
        %v582 = vunpack.c.l.b16 %v546
        %v583 = vunpack.c.l.b16 %v547
        %v584 = vunpack.c.l.b16 %v548
        %v585 = vunpack.c.l.b16 %v549
        %v586 = vunpack.c.l.b16 %v550
        %v587 = vunpack.c.l.b16 %v551
        %v588 = vunpack.c.l.b16 %v552
        %v589 = vunpack.c.l.b16 %v553
        %v590 = vunpack.c.l.b16 %v554
        %v591 = vunpack.c.l.b16 %v555
        %v592 = vunpack.c.l.b16 %v556
        %v593 = vpack.c.b16 %v578, %v577
        %v594 = vpack.c.b16 %v580, %v579
        %v595 = vpack.c.b16 %v582, %v581
        %v596 = vpack.c.b16 %v584, %v583
        %v597 = vpack.c.b16 %v586, %v585
        %v598 = vpack.c.b16 %v588, %v587
        %v599 = vpack.c.b16 %v590, %v589
        %v600 = vpack.c.b16 %v592, %v591
        %609 = vmatpush.bf16.msra.mxu0 %v600
        %610 = vmatpush.bf16.msra.mxu0 %v599
        %611 = vmatpush.bf16.msra.mxu0 %v598
        %612 = vmatpush.bf16.msra.mxu0 %v597
        %613 = vmatpush.bf16.msra.mxu0 %v596
        %614 = vmatpush.bf16.msra.mxu0 %v595
        %615 = vmatpush.bf16.msra.mxu0 %v594
        %616 = vmatpush.bf16.msra.mxu0 %v593
        %617 = vmatmul.bf16.gmra.mxu0 %v533
        %v618 = vpop.f32.mrf.mxu0
        %v619 = vadd.f32 %v559, %v618
        %v620 = vpop.f32.mrf.mxu0
        %v621 = vadd.f32 %v559, %v620
        %622 = vmatmul.bf16.gmra.mxu0 %v534
        %v623 = vpop.f32.mrf.mxu0
        %v624 = vadd.f32 %v559, %v623
        %v625 = vpop.f32.mrf.mxu0
        %v626 = vadd.f32 %v559, %v625
        %627 = vmatmul.bf16.gmra.mxu0 %v535
        %v628 = vpop.f32.mrf.mxu0
        %v629 = vadd.f32 %v559, %v628
        %v630 = vpop.f32.mrf.mxu0
        %v631 = vadd.f32 %v559, %v630
        %632 = vmatmul.bf16.gmra.mxu0 %v536
        %v633 = vpop.f32.mrf.mxu0
        %v634 = vadd.f32 %v559, %v633
        %v635 = vpop.f32.mrf.mxu0
        %v636 = vadd.f32 %v559, %v635
        %637 = vmatmul.bf16.gmra.mxu0 %v537
        %v638 = vpop.f32.mrf.mxu0
        %v639 = vadd.f32 %v559, %v638
        %v640 = vpop.f32.mrf.mxu0
        %v641 = vadd.f32 %v559, %v640
        %642 = vmatmul.bf16.gmra.mxu0 %v538
        %v643 = vpop.f32.mrf.mxu0
        %v644 = vadd.f32 %v559, %v643
        %v645 = vpop.f32.mrf.mxu0
        %v646 = vadd.f32 %v559, %v645
        %647 = vmatmul.bf16.gmra.mxu0 %v539
        %v648 = vpop.f32.mrf.mxu0
        %v649 = vadd.f32 %v559, %v648
        %v650 = vpop.f32.mrf.mxu0
        %v651 = vadd.f32 %v559, %v650
        %652 = vmatmul.bf16.gmra.mxu0 %v540
        %v653 = vpop.f32.mrf.mxu0
        %v654 = vadd.f32 %v559, %v653
        %v655 = vpop.f32.mrf.mxu0
        %v656 = vadd.f32 %v559, %v655
        %657 = vdwg.mxu0
        %vm658 = vcmp.gt.f32.partialorder %v619, 0.0
        %vm659 = vcmp.gt.f32.partialorder %v621, 0.0
        %vm660 = vcmp.gt.f32.partialorder %v624, 0.0
        %vm661 = vcmp.gt.f32.partialorder %v626, 0.0
        %vm662 = vcmp.gt.f32.partialorder %v629, 0.0
        %vm663 = vcmp.gt.f32.partialorder %v631, 0.0
        %vm664 = vcmp.gt.f32.partialorder %v634, 0.0
        %vm665 = vcmp.gt.f32.partialorder %v636, 0.0
        %vm666 = vcmp.gt.f32.partialorder %v639, 0.0
        %vm667 = vcmp.gt.f32.partialorder %v641, 0.0
        %vm668 = vcmp.gt.f32.partialorder %v644, 0.0
        %vm669 = vcmp.gt.f32.partialorder %v646, 0.0
        %vm670 = vcmp.gt.f32.partialorder %v649, 0.0
        %vm671 = vcmp.gt.f32.partialorder %v651, 0.0
        %vm672 = vcmp.gt.f32.partialorder %v654, 0.0
        %vm673 = vcmp.gt.f32.partialorder %v656, 0.0
        %v674 = vmul.f32 %v619, 0.01
        %v675 = vmul.f32 %v621, 0.01
        %v676 = vmul.f32 %v624, 0.01
        %v677 = vmul.f32 %v626, 0.01
        %v678 = vmul.f32 %v629, 0.01
        %v679 = vmul.f32 %v631, 0.01
        %v680 = vmul.f32 %v634, 0.01
        %v681 = vmul.f32 %v636, 0.01
        %v682 = vmul.f32 %v639, 0.01
        %v683 = vmul.f32 %v641, 0.01
        %v684 = vmul.f32 %v644, 0.01
        %v685 = vmul.f32 %v646, 0.01
        %v686 = vmul.f32 %v649, 0.01
        %v687 = vmul.f32 %v651, 0.01
        %v688 = vmul.f32 %v654, 0.01
        %v689 = vmul.f32 %v656, 0.01
        %v690 = vsel %vm658, %v619, %v674
        %v691 = vsel %vm659, %v621, %v675
        %v692 = vsel %vm660, %v624, %v676
        %v693 = vsel %vm661, %v626, %v677
        %v694 = vsel %vm662, %v629, %v678
        %v695 = vsel %vm663, %v631, %v679
        %v696 = vsel %vm664, %v634, %v680
        %v697 = vsel %vm665, %v636, %v681
        %v698 = vsel %vm666, %v639, %v682
        %v699 = vsel %vm667, %v641, %v683
        %v700 = vsel %vm668, %v644, %v684
        %v701 = vsel %vm669, %v646, %v685
        %v702 = vsel %vm670, %v649, %v686
        %v703 = vsel %vm671, %v651, %v687
        %v704 = vsel %vm672, %v654, %v688
        %v705 = vsel %vm673, %v656, %v689
        %v706 = vpack.c.bf16 %v691, %v690
        %v707 = vpack.c.bf16 %v693, %v692
        %v708 = vpack.c.bf16 %v695, %v694
        %v709 = vpack.c.bf16 %v697, %v696
        %v710 = vpack.c.bf16 %v699, %v698
        %v711 = vpack.c.bf16 %v701, %v700
        %v712 = vpack.c.bf16 %v703, %v702
        %v713 = vpack.c.bf16 %v705, %v704
        %v714 = vld [vmem:[%s5] sm:$0xf]
        %v715 = vld [vmem:[%s5 + $0x4] sm:$0xf]
        %v716 = vld [vmem:[%s5 + $0x8] sm:$0xf]
        %v717 = vld [vmem:[%s5 + $0xc] sm:$0xf]
        %v718 = vld [vmem:[%s5 + $0x10] sm:$0xf]
        %v719 = vld [vmem:[%s5 + $0x14] sm:$0xf]
        %v720 = vld [vmem:[%s5 + $0x18] sm:$0xf]
        %v721 = vld [vmem:[%s5 + $0x1c] sm:$0xf]
        %v722 = vld [vmem:[%s5 + $0x20] sm:$0xf]
        %v723 = vld [vmem:[%s5 + $0x24] sm:$0xf]
        %v724 = vld [vmem:[%s5 + $0x28] sm:$0xf]
        %v725 = vld [vmem:[%s5 + $0x2c] sm:$0xf]
        %v726 = vld [vmem:[%s5 + $0x30] sm:$0xf]
        %v727 = vld [vmem:[%s5 + $0x34] sm:$0xf]
        %v728 = vld [vmem:[%s5 + $0x38] sm:$0xf]
        %v729 = vld [vmem:[%s5 + $0x3c] sm:$0xf]
        %v730 = vld [vmem:[%s6] sm:$0x1]
        %v732 = vperm.slane %v730, 0
        %v750 = vunpack.c.l.b16 %v714
        %v751 = vunpack.c.l.b16 %v715
        %v752 = vunpack.c.l.b16 %v716
        %v753 = vunpack.c.l.b16 %v717
        %v754 = vunpack.c.l.b16 %v718
        %v755 = vunpack.c.l.b16 %v719
        %v756 = vunpack.c.l.b16 %v720
        %v757 = vunpack.c.l.b16 %v721
        %v758 = vunpack.c.l.b16 %v722
        %v759 = vunpack.c.l.b16 %v723
        %v760 = vunpack.c.l.b16 %v724
        %v761 = vunpack.c.l.b16 %v725
        %v762 = vunpack.c.l.b16 %v726
        %v763 = vunpack.c.l.b16 %v727
        %v764 = vunpack.c.l.b16 %v728
        %v765 = vunpack.c.l.b16 %v729
        %v766 = vpack.c.b16 %v751, %v750
        %v767 = vpack.c.b16 %v753, %v752
        %v768 = vpack.c.b16 %v755, %v754
        %v769 = vpack.c.b16 %v757, %v756
        %v770 = vpack.c.b16 %v759, %v758
        %v771 = vpack.c.b16 %v761, %v760
        %v772 = vpack.c.b16 %v763, %v762
        %v773 = vpack.c.b16 %v765, %v764
        %782 = vmatpush.bf16.msra.mxu0 %v773
        %783 = vmatpush.bf16.msra.mxu0 %v772
        %784 = vmatpush.bf16.msra.mxu0 %v771
        %785 = vmatpush.bf16.msra.mxu0 %v770
        %786 = vmatpush.bf16.msra.mxu0 %v769
        %787 = vmatpush.bf16.msra.mxu0 %v768
        %788 = vmatpush.bf16.msra.mxu0 %v767
        %789 = vmatpush.bf16.msra.mxu0 %v766
        %790 = vmatmul.bf16.gmra.mxu0 %v706
        %v791 = vpop.f32.mrf.mxu0
        %v792 = vadd.f32 %v732, %v791
        %v793 = vpop.f32.mrf.mxu0
        %v794 = vadd.f32 %v732, %v793
        %795 = vmatmul.bf16.gmra.mxu0 %v707
        %v796 = vpop.f32.mrf.mxu0
        %v797 = vadd.f32 %v732, %v796
        %v798 = vpop.f32.mrf.mxu0
        %v799 = vadd.f32 %v732, %v798
        %800 = vmatmul.bf16.gmra.mxu0 %v708
        %v801 = vpop.f32.mrf.mxu0
        %v802 = vadd.f32 %v732, %v801
        %v803 = vpop.f32.mrf.mxu0
        %v804 = vadd.f32 %v732, %v803
        %805 = vmatmul.bf16.gmra.mxu0 %v709
        %v806 = vpop.f32.mrf.mxu0
        %v807 = vadd.f32 %v732, %v806
        %v808 = vpop.f32.mrf.mxu0
        %v809 = vadd.f32 %v732, %v808
        %810 = vmatmul.bf16.gmra.mxu0 %v710
        %v811 = vpop.f32.mrf.mxu0
        %v812 = vadd.f32 %v732, %v811
        %v813 = vpop.f32.mrf.mxu0
        %v814 = vadd.f32 %v732, %v813
        %815 = vmatmul.bf16.gmra.mxu0 %v711
        %v816 = vpop.f32.mrf.mxu0
        %v817 = vadd.f32 %v732, %v816
        %v818 = vpop.f32.mrf.mxu0
        %v819 = vadd.f32 %v732, %v818
        %820 = vmatmul.bf16.gmra.mxu0 %v712
        %v821 = vpop.f32.mrf.mxu0
        %v822 = vadd.f32 %v732, %v821
        %v823 = vpop.f32.mrf.mxu0
        %v824 = vadd.f32 %v732, %v823
        %825 = vmatmul.bf16.gmra.mxu0 %v713
        %v826 = vpop.f32.mrf.mxu0
        %v827 = vadd.f32 %v732, %v826
        %v828 = vpop.f32.mrf.mxu0
        %v829 = vadd.f32 %v732, %v828
        %830 = vdwg.mxu0
        %vm831 = vcmp.gt.f32.partialorder %v792, 0.0
        %vm832 = vcmp.gt.f32.partialorder %v794, 0.0
        %vm833 = vcmp.gt.f32.partialorder %v797, 0.0
        %vm834 = vcmp.gt.f32.partialorder %v799, 0.0
        %vm835 = vcmp.gt.f32.partialorder %v802, 0.0
        %vm836 = vcmp.gt.f32.partialorder %v804, 0.0
        %vm837 = vcmp.gt.f32.partialorder %v807, 0.0
        %vm838 = vcmp.gt.f32.partialorder %v809, 0.0
        %vm839 = vcmp.gt.f32.partialorder %v812, 0.0
        %vm840 = vcmp.gt.f32.partialorder %v814, 0.0
        %vm841 = vcmp.gt.f32.partialorder %v817, 0.0
        %vm842 = vcmp.gt.f32.partialorder %v819, 0.0
        %vm843 = vcmp.gt.f32.partialorder %v822, 0.0
        %vm844 = vcmp.gt.f32.partialorder %v824, 0.0
        %vm845 = vcmp.gt.f32.partialorder %v827, 0.0
        %vm846 = vcmp.gt.f32.partialorder %v829, 0.0
        %v847 = vmul.f32 %v792, 0.01
        %v848 = vmul.f32 %v794, 0.01
        %v849 = vmul.f32 %v797, 0.01
        %v850 = vmul.f32 %v799, 0.01
        %v851 = vmul.f32 %v802, 0.01
        %v852 = vmul.f32 %v804, 0.01
        %v853 = vmul.f32 %v807, 0.01
        %v854 = vmul.f32 %v809, 0.01
        %v855 = vmul.f32 %v812, 0.01
        %v856 = vmul.f32 %v814, 0.01
        %v857 = vmul.f32 %v817, 0.01
        %v858 = vmul.f32 %v819, 0.01
        %v859 = vmul.f32 %v822, 0.01
        %v860 = vmul.f32 %v824, 0.01
        %v861 = vmul.f32 %v827, 0.01
        %v862 = vmul.f32 %v829, 0.01
        %v863 = vsel %vm831, %v792, %v847
        %v864 = vsel %vm832, %v794, %v848
        %v865 = vsel %vm833, %v797, %v849
        %v866 = vsel %vm834, %v799, %v850
        %v867 = vsel %vm835, %v802, %v851
        %v868 = vsel %vm836, %v804, %v852
        %v869 = vsel %vm837, %v807, %v853
        %v870 = vsel %vm838, %v809, %v854
        %v871 = vsel %vm839, %v812, %v855
        %v872 = vsel %vm840, %v814, %v856
        %v873 = vsel %vm841, %v817, %v857
        %v874 = vsel %vm842, %v819, %v858
        %v875 = vsel %vm843, %v822, %v859
        %v876 = vsel %vm844, %v824, %v860
        %v877 = vsel %vm845, %v827, %v861
        %v878 = vsel %vm846, %v829, %v862
        %v879 = vld [vmem:[%s7] sm:$0x1]
        %v881 = vperm.slane %v879, 0
        %v883 = vmul.f32 %v863, %v881
        %v884 = vmul.f32 %v864, %v881
        %v885 = vmul.f32 %v865, %v881
        %v886 = vmul.f32 %v866, %v881
        %v887 = vmul.f32 %v867, %v881
        %v888 = vmul.f32 %v868, %v881
        %v889 = vmul.f32 %v869, %v881
        %v890 = vmul.f32 %v870, %v881
        %v891 = vmul.f32 %v871, %v881
        %v892 = vmul.f32 %v872, %v881
        %v893 = vmul.f32 %v873, %v881
        %v894 = vmul.f32 %v874, %v881
        %v895 = vmul.f32 %v875, %v881
        %v896 = vmul.f32 %v876, %v881
        %v897 = vmul.f32 %v877, %v881
        %v898 = vmul.f32 %v878, %v881
        %899 = vadd.xlane.f32.xlu0 %v883
        %v900 = vpop.xlane.xlu0 %899
        %901 = vadd.xlane.f32.xlu0 %v884
        %v902 = vpop.xlane.xlu0 %901
        %903 = vadd.xlane.f32.xlu0 %v885
        %v904 = vpop.xlane.xlu0 %903
        %905 = vadd.xlane.f32.xlu0 %v886
        %v906 = vpop.xlane.xlu0 %905
        %907 = vadd.xlane.f32.xlu0 %v887
        %v908 = vpop.xlane.xlu0 %907
        %909 = vadd.xlane.f32.xlu0 %v888
        %v910 = vpop.xlane.xlu0 %909
        %911 = vadd.xlane.f32.xlu0 %v889
        %v912 = vpop.xlane.xlu0 %911
        %913 = vadd.xlane.f32.xlu0 %v890
        %v914 = vpop.xlane.xlu0 %913
        %915 = vadd.xlane.f32.xlu0 %v891
        %v916 = vpop.xlane.xlu0 %915
        %917 = vadd.xlane.f32.xlu0 %v892
        %v918 = vpop.xlane.xlu0 %917
        %919 = vadd.xlane.f32.xlu0 %v893
        %v920 = vpop.xlane.xlu0 %919
        %921 = vadd.xlane.f32.xlu0 %v894
        %v922 = vpop.xlane.xlu0 %921
        %923 = vadd.xlane.f32.xlu0 %v895
        %v924 = vpop.xlane.xlu0 %923
        %925 = vadd.xlane.f32.xlu0 %v896
        %v926 = vpop.xlane.xlu0 %925
        %927 = vadd.xlane.f32.xlu0 %v897
        %v928 = vpop.xlane.xlu0 %927
        %929 = vadd.xlane.f32.xlu0 %v898
        %v930 = vpop.xlane.xlu0 %929
        %v931 = vld [vmem:[#allocation2] sm:$0x1]
        %933 = vset.pattern.permute.xlu0 0
        %934 = vperm.xlu0 %933, %v931
        %v935 = vpop.permute.xlu0 %934
        %v937 = vperm.slane %v935, 0
        %v938 = vadd.f32 %v900, %v937
        %v939 = vadd.f32 %v902, %v937
        %v940 = vadd.f32 %v904, %v937
        %v941 = vadd.f32 %v906, %v937
        %v942 = vadd.f32 %v908, %v937
        %v943 = vadd.f32 %v910, %v937
        %v944 = vadd.f32 %v912, %v937
        %v945 = vadd.f32 %v914, %v937
        %v946 = vadd.f32 %v916, %v937
        %v947 = vadd.f32 %v918, %v937
        %v948 = vadd.f32 %v920, %v937
        %v949 = vadd.f32 %v922, %v937
        %v950 = vadd.f32 %v924, %v937
        %v951 = vadd.f32 %v926, %v937
        %v952 = vadd.f32 %v928, %v937
        %v953 = vadd.f32 %v930, %v937
        %v970 = vlaneseq
        %v971 = vand.u32 %v970, 127
        %v972 = vperm.slane %v938, %v971
        %v973 = vadd.s32 %v971, 4294967288
        %v974 = vperm.slane %v939, %v973
        %vm975 = vcmask 130112
        %v976 = vsel %vm975, %v974, %v972
        %v977 = vadd.s32 %v971, 4294967280
        %v978 = vperm.slane %v940, %v977
        %vm979 = vcmask 195712
        %v980 = vsel %vm979, %v978, %v976
        %v981 = vadd.s32 %v971, 4294967272
        %v982 = vperm.slane %v941, %v981
        %vm983 = vcmask 261312
        %v984 = vsel %vm983, %v982, %v980
        %v985 = vadd.s32 %v971, 4294967264
        %v986 = vperm.slane %v942, %v985
        %vm987 = vcmask 326912
        %v988 = vsel %vm987, %v986, %v984
        %v989 = vadd.s32 %v971, 4294967256
        %v990 = vperm.slane %v943, %v989
        %vm991 = vcmask 392512
        %v992 = vsel %vm991, %v990, %v988
        %v993 = vadd.s32 %v971, 4294967248
        %v994 = vperm.slane %v944, %v993
        %vm995 = vcmask 458112
        %v996 = vsel %vm995, %v994, %v992
        %v997 = vadd.s32 %v971, 4294967240
        %v998 = vperm.slane %v945, %v997
        %vm999 = vcmask 523712
        %v1000 = vsel %vm999, %v998, %v996
        %v1001 = vadd.s32 %v971, 4294967232
        %v1002 = vperm.slane %v946, %v1001
        %vm1003 = vcmask 589312
        %v1004 = vsel %vm1003, %v1002, %v1000
        %v1005 = vadd.s32 %v971, 4294967224
        %v1006 = vperm.slane %v947, %v1005
        %vm1007 = vcmask 654912
        %v1008 = vsel %vm1007, %v1006, %v1004
        %v1009 = vadd.s32 %v971, 4294967216
        %v1010 = vperm.slane %v948, %v1009
        %vm1011 = vcmask 720512
        %v1012 = vsel %vm1011, %v1010, %v1008
        %v1013 = vadd.s32 %v971, 4294967208
        %v1014 = vperm.slane %v949, %v1013
        %vm1015 = vcmask 786112
        %v1016 = vsel %vm1015, %v1014, %v1012
        %v1017 = vadd.s32 %v971, 4294967200
        %v1018 = vperm.slane %v950, %v1017
        %vm1019 = vcmask 851712
        %v1020 = vsel %vm1019, %v1018, %v1016
        %v1021 = vadd.s32 %v971, 4294967192
        %v1022 = vperm.slane %v951, %v1021
        %vm1023 = vcmask 917312
        %v1024 = vsel %vm1023, %v1022, %v1020
        %v1025 = vadd.s32 %v971, 4294967184
        %v1026 = vperm.slane %v952, %v1025
        %vm1027 = vcmask 982912
        %v1028 = vsel %vm1027, %v1026, %v1024
        %v1029 = vadd.s32 %v971, 4294967176
        %v1030 = vperm.slane %v953, %v1029
        %vm1031 = vcmask 1048512
        %v1032 = vsel %vm1031, %v1030, %v1028
        %1034 = vst [vmem:[%s327] sm:$0x1] %v1032
        %s1035 = sand.u32 %s227, 1
        %s1036 = scalar_lea.sflag [#allocation4], %s1035
        %s1037 = sand.u32 %s227, 1
        %s1038 = scalar_lea.vmem [#allocation3], %s1037
        // Predicated region
        $region57: #{simple_nn_forward.1} parent=55 // pred_check
          %p1039 = pneg %p237
        $region58: #{simple_nn_forward.1} parent=55 // pred_check_branch
          %1041 = sbr.rel (%p1039) target = $region60
        $region59: #{simple_nn_forward.1} parent=55 // pred_region
          %1043 = vsyncadd %s1036, 0
          %s1044 = scalar_lea.hbm %s9, %s25
          %s1046 = sshll.u32 %s1038, 4
          %s1047 = int_to_ptr.vmem [resolvable:$true] %s1046
          %s1048 = sshll.u32 %s1044, 4
          %s1049 = int_to_ptr.hbm [resolvable:$true] %s1048
          %1051 = dma.vmem_to_hbm [thread:$0]  %s1047, 16, %s1049, %s1036
        $region60: #{simple_nn_forward.1} parent=55 // pred_fallthru
          _
      $region56: #{simple_nn_forward.1} parent=5 // pred_fallthru
        _
      %p1052 = scmp.le.s32.totalorder 2, %s20
      // Predicated region
      $region61: #{simple_nn_forward.1} parent=5 // pred_check
        %p1053 = pneg %p1052
      $region62: #{simple_nn_forward.1} parent=5 // pred_check_branch
        %1055 = sbr.rel (%p1053) target = $region64
      $region63: #{simple_nn_forward.1} parent=5 // pred_region
        %s1056 = ssub.s32 %s20, 2
        // Predicated region
        $region65: #{simple_nn_forward.1} parent=63 // pred_check
          %p1057 = pneg %p243
        $region66: #{simple_nn_forward.1} parent=63 // pred_check_branch
          %1059 = sbr.rel (%p1057) target = $region68
        $region67: #{simple_nn_forward.1} parent=63 // pred_region
          %s1060 = sand.u32 %s228, 1
          %s1061 = scalar_lea.sflag [#allocation4], %s1060
          %s1062 = sand.u32 %s228, 1
          %s1063 = scalar_lea.vmem [#allocation3], %s1062
          %1065 = dma.done %s1061, 16
        $region68: #{simple_nn_forward.1} parent=63 // pred_fallthru
          _
      $region64: #{simple_nn_forward.1} parent=5 // pred_fallthru
        _
    $region6: #{simple_nn_forward.1} parent=1 // loop_footer
      %s24 = sadd.s32 1, %s20
    $region7: #{simple_nn_forward.1} parent=1 // loop_footer_branch
      %19 = sbr.rel target = $region3
    $region8: #{simple_nn_forward.1} parent=1 // loop_exit
      _
    %1066 = vsyncpa [#allocation4], 1
    %s1067 = scalar_lea.sflag [#allocation4], 1
    %1068 = vsyncpa %s1067, 1

</llo_original>
